<compile_context>
chip_gen: v7x
topology: tpu7x:2x2x1
jax: 0.10.0
libtpu: 0.0.40
codegen_flags: <defaults>
</compile_context>

<pallas_src>
import functools
import math

import jax
import jax.numpy as jnp
from jax.experimental import pallas as pl
from jax.experimental.pallas import tpu as pltpu


def _round_up(x, m):
    return ((x + m - 1) // m) * m


# ---------------------------------------------------------------------------
# Kernel: one batch tile of the whole forward pass (three MXU matmuls).
# ---------------------------------------------------------------------------
def _cnn_kernel(x_ref, w1_ref, b1_ref, w2_ref, b2_ref, w3_ref, b3_ref, o_ref,
                *, to_binary):
    """Shapes (all lane-dense, padded to multiples of 128 on the last dim):
    x_ref  : (TB, CLP)      input tile, NCL flattened (row index c*L + l)
    w1_ref : (CLP, KP)      conv1 as banded matrix (col index t*32 + o)
    b1_ref : (1, KP)        conv1 bias tiled over the K output positions (f32)
    w2_ref : (KP, H2P)      conv2 weight (row index t*32 + o)
    b2_ref : (1, H2P)
    w3_ref : (H2P, OUT_PAD) conv3 (1x1) weight
    b3_ref : (1, OUT_PAD)
    o_ref  : (TB, OUT_PAD)  lane-dense f32 output tile
    """
    cdt = x_ref.dtype  # MXU compute dtype (bf16 by default); accumulation is f32.

    # conv1 + relu: one MXU matmul covers all K output positions.
    h1 = jnp.dot(x_ref[...], w1_ref[...], preferred_element_type=jnp.float32)
    h1 = jnp.maximum(h1 + b1_ref[...], 0.0).astype(cdt)           # (TB, KP)

    # conv2 (output length 1) + relu.
    h2 = jnp.dot(h1, w2_ref[...], preferred_element_type=jnp.float32)
    h2 = jnp.maximum(h2 + b2_ref[...], 0.0).astype(cdt)           # (TB, H2P)

    # conv3 (kernel_size = 1) == dense layer.
    y = jnp.dot(h2, w3_ref[...], preferred_element_type=jnp.float32) + b3_ref[...]
    if to_binary:
        y = jax.nn.sigmoid(y)                                     # EUP, f32
    o_ref[...] = y.astype(o_ref.dtype)                            # unmasked vst


# ---------------------------------------------------------------------------
# One-time weight re-layout (hoisted out of the per-forward path).
# ---------------------------------------------------------------------------
def prepare_cnn_params(params, *, compute_dtype=jnp.bfloat16):
    """Build the banded conv1 matrix, transposed conv2/conv3 weights, and the
    lane-dense (multiple-of-128) zero padding, ONCE per parameter set."""
    f32 = jnp.float32
    w1 = jnp.asarray(params["w1"], f32)            # (32, C, K)
    n1, C, K = w1.shape
    L = 2 * K - 1                                  # K = (L-1)//2 + 1  =>  L = 2K-1
    w2 = jnp.asarray(params["w2"], f32)            # (64, 32, K)
    n2 = w2.shape[0]
    w3 = jnp.asarray(params["w3"], f32)            # (OUT, 64, 1)
    out = w3.shape[0]

    CL, K32 = C * L, K * n1
    CLP = _round_up(CL, 128)
    KP = _round_up(K32, 128)
    H2P = _round_up(n2, 128)
    OUT_PAD = _round_up(out, 128)

    # conv1 as a banded (Toeplitz-style) matrix:
    #   W_big[c*L + l, t*32 + o] = W1[o, c, l - t]  for 0 <= l - t < K, else 0
    w1_cko = jnp.transpose(w1, (1, 2, 0))          # (C, K, 32)
    w_big = jnp.zeros((C, L, K, n1), f32)
    for t in range(K):                             # K is small and static
        w_big = w_big.at[:, t:t + K, t, :].set(w1_cko)
    w_big = jnp.pad(w_big.reshape(CL, K32), ((0, CLP - CL), (0, KP - K32)))

    b1 = jnp.pad(jnp.tile(jnp.asarray(params["b1"], f32).reshape(1, n1), (1, K)),
                 ((0, 0), (0, KP - K32)))

    # conv2: row index t*32 + o  ->  W2[oo, o, t]
    w2_t = jnp.pad(jnp.transpose(w2, (2, 1, 0)).reshape(K32, n2),
                   ((0, KP - K32), (0, H2P - n2)))
    b2 = jnp.pad(jnp.asarray(params["b2"], f32).reshape(1, n2),
                 ((0, 0), (0, H2P - n2)))

    # conv3 (1x1), transposed, lane-dense.
    w3_t = jnp.pad(w3.reshape(out, n2).T, ((0, H2P - n2), (0, OUT_PAD - out)))
    b3 = jnp.pad(jnp.asarray(params["b3"], f32).reshape(1, out),
                 ((0, 0), (0, OUT_PAD - out)))

    # Matmul operands go to the MXU compute dtype; biases stay f32 (VPU adds).
    return (w_big.astype(compute_dtype), b1, w2_t.astype(compute_dtype), b2,
            w3_t.astype(compute_dtype), b3)


# ---------------------------------------------------------------------------
# Forward (jitted per parameter set via make_cnn_forward).
# ---------------------------------------------------------------------------
def _forward_impl(x, prep, *, out_features, to_binary, batch_tile):
    w_big, b1, w2, b2, w3, b3 = prep
    B = x.shape[0]
    CLP, KP = w_big.shape
    H2P = w2.shape[1]
    OUT_PAD = w3.shape[1]
    cdt = w_big.dtype
    itemsize = jnp.dtype(cdt).itemsize
    sub = 8 * (4 // itemsize)              # sublane packing: 8 rows f32, 16 rows bf16

    if batch_tile is None:
        if B <= sub:
            TB = sub
        else:
            # >=2 parallel grid steps (keeps both v7x TensorCores busy) while
            # growing tiles up to 512 rows so the ~0.35us/step overhead is
            # amortised.  Sweep 256/512/1024 for a specific workload.
            TB = max(sub, min(512, _round_up(-(-B // 2), sub)))
    else:
        TB = _round_up(batch_tile, sub)
    B_pad = _round_up(B, TB)

    # Flatten NCL -> (B, C*L); pad batch + contraction dims (zero rows are inert).
    x2d = x.reshape(B, -1).astype(cdt)
    CL = x2d.shape[1]
    x2d = jnp.pad(x2d, ((0, B_pad - B), (0, CLP - CL)))

    # Advisory cost estimate so XLA schedules the surrounding pad/slice sensibly.
    flops = 2 * B_pad * (CLP * KP + KP * H2P + H2P * OUT_PAD)
    transcendentals = B_pad * OUT_PAD if to_binary else 0
    w_bytes = (CLP * KP + KP * H2P + H2P * OUT_PAD) * itemsize + (KP + H2P + OUT_PAD) * 4
    bytes_accessed = B_pad * CLP * itemsize + w_bytes + B_pad * OUT_PAD * 4

    # VMEM budget: double-buffered x/out tiles + resident weights + staged h1/h2.
    vmem_need = (2 * TB * CLP * itemsize + 2 * TB * OUT_PAD * 4
                 + 2 * w_bytes + 2 * TB * (KP + H2P) * 4)
    vmem_limit = int(min(64 * 1024 * 1024, max(16 * 1024 * 1024, 2 * vmem_need)))

    kernel = functools.partial(_cnn_kernel, to_binary=bool(to_binary))

    y_pad = pl.pallas_call(
        kernel,
        out_shape=jax.ShapeDtypeStruct((B_pad, OUT_PAD), jnp.float32),
        grid=(B_pad // TB,),
        in_specs=[
            pl.BlockSpec((TB, CLP), lambda i: (i, 0)),          # x tile (per step DMA)
            # grid-invariant operands: fetched once, resident across all steps
            pl.BlockSpec((CLP, KP), lambda i: (0, 0)),
            pl.BlockSpec((1, KP), lambda i: (0, 0)),
            pl.BlockSpec((KP, H2P), lambda i: (0, 0)),
            pl.BlockSpec((1, H2P), lambda i: (0, 0)),
            pl.BlockSpec((H2P, OUT_PAD), lambda i: (0, 0)),
            pl.BlockSpec((1, OUT_PAD), lambda i: (0, 0)),
        ],
        out_specs=pl.BlockSpec((TB, OUT_PAD), lambda i: (i, 0)),
        compiler_params=pltpu.CompilerParams(
            dimension_semantics=("parallel",),
            vmem_limit_bytes=vmem_limit),
        cost_estimate=pl.CostEstimate(
            flops=flops, transcendentals=transcendentals,
            bytes_accessed=bytes_accessed),
    )(x2d, w_big, b1, w2, b2, w3, b3)

    return y_pad[:B, :out_features]


def make_cnn_forward(params, *, to_binary=0, compute_dtype=jnp.bfloat16,
                     batch_tile=None):
    """Build a jitted forward for one parameter set; the weight re-layout
    (banded conv1 matrix, transposes, padding) is done once here, not per call."""
    prep = prepare_cnn_params(params, compute_dtype=compute_dtype)
    out_features = int(params["w3"].shape[0])
    fwd = jax.jit(functools.partial(
        _forward_impl, out_features=out_features,
        to_binary=int(to_binary), batch_tile=batch_tile))
    return lambda x: fwd(x, prep)


# ---------------------------------------------------------------------------
# Init + pure-JAX reference (for the correctness check).
# ---------------------------------------------------------------------------
def init_params(key, out, inp, channel):
    """Deterministic init mirroring init_layer (Kaiming-uniform-like, zero bias)."""
    K = (inp - 1) // 2 + 1
    k1, k2, k3 = jax.random.split(key, 3)

    def uinit(k, shape, n):
        scale = math.sqrt(2.0 / n) * math.sqrt(3.0)
        return jax.random.uniform(k, shape, jnp.float32, minval=-scale, maxval=scale)

    return {
        "w1": uinit(k1, (32, channel, K), channel * K),
        "b1": jnp.zeros((32,), jnp.float32),
        "w2": uinit(k2, (64, 32, K), 32 * K),
        "b2": jnp.zeros((64,), jnp.float32),
        "w3": uinit(k3, (out, 64, 1), 64 * 1),
        "b3": jnp.zeros((out,), jnp.float32),
    }


def reference_forward(x, params, *, to_binary=0):
    """Pure-JAX reference matching the PyTorch forward."""
    def conv1d(a, w, b):
        y = jax.lax.conv_general_dilated(
            a, w, window_strides=(1,), padding="VALID",
            dimension_numbers=("NCH", "OIH", "NCH"))
        return y + b[None, :, None]

    h = jax.nn.relu(conv1d(x, params["w1"], params["b1"]))
    h = jax.nn.relu(conv1d(h, params["w2"], params["b2"]))
    y = conv1d(h, params["w3"], params["b3"])
    y = y.reshape(y.shape[0], -1)
    return jax.nn.sigmoid(y) if to_binary == 1 else y


if __name__ == "__main__":
    # small shapes consistent with the module: seq_len must be odd
    B, C, L, OUT = 2, 4, 9, 8

    key = jax.random.PRNGKey(0)
    kp, kx = jax.random.split(key)
    params = init_params(kp, OUT, L, C)
    x = jax.random.normal(kx, (B, C, L), dtype=jnp.float32)

    for to_binary in (0, 1):
        y_ref = reference_forward(x, params, to_binary=to_binary)

        # f32 compute path: exact-semantics check.
        fwd_f32 = make_cnn_forward(params, to_binary=to_binary,
                                   compute_dtype=jnp.float32)
        y32 = jax.block_until_ready(fwd_f32(x))
        assert y32.shape == (B, OUT)
        assert jnp.allclose(y32, y_ref, atol=1e-5, rtol=1e-5), (
            f"f32 mismatch (to_binary={to_binary}): "
            f"max abs err {jnp.max(jnp.abs(y32 - y_ref))}")

        # bf16 compute path (production default): loose tolerance vs f32 reference.
        fwd_bf16 = make_cnn_forward(params, to_binary=to_binary)
        y16 = jax.block_until_ready(fwd_bf16(x))
        assert y16.shape == (B, OUT)
        assert jnp.allclose(y16, y_ref, atol=1e-1, rtol=1e-1), (
            f"bf16 mismatch (to_binary={to_binary}): "
            f"max abs err {jnp.max(jnp.abs(y16 - y_ref))}")

    print("KERNEL_OK")
</pallas_src>

<mosaic_0001>
module attributes {stable_mosaic.version = 11 : i64} {
  func.func @_cnn_kernel(%arg0: i32, %arg1: memref<8x128xf32, #tpu.memory_space<vmem>>, %arg2: memref<128x256xf32, #tpu.memory_space<vmem>>, %arg3: memref<1x256xf32, #tpu.memory_space<vmem>>, %arg4: memref<256x128xf32, #tpu.memory_space<vmem>>, %arg5: memref<1x128xf32, #tpu.memory_space<vmem>>, %arg6: memref<128x128xf32, #tpu.memory_space<vmem>>, %arg7: memref<1x128xf32, #tpu.memory_space<vmem>>, %arg8: memref<8x128xf32, #tpu.memory_space<vmem>>) attributes {dimension_semantics = [#tpu.dimension_semantics<parallel>], iteration_bounds = array<i64: 1>, scalar_prefetch = 0 : i64, scratch_operands = 0 : i64, tpu.core_type = #tpu.core_type<tc>, window_params = [{transform_indices = @transform_0, window_bounds = array<i64: 8, 128>}, {pipeline_mode = #tpu.pipeline_mode<synchronous>, transform_indices = @transform_1, window_bounds = array<i64: 128, 256>}, {pipeline_mode = #tpu.pipeline_mode<synchronous>, transform_indices = @transform_2, window_bounds = array<i64: 1, 256>}, {pipeline_mode = #tpu.pipeline_mode<synchronous>, transform_indices = @transform_3, window_bounds = array<i64: 256, 128>}, {pipeline_mode = #tpu.pipeline_mode<synchronous>, transform_indices = @transform_4, window_bounds = array<i64: 1, 128>}, {pipeline_mode = #tpu.pipeline_mode<synchronous>, transform_indices = @transform_5, window_bounds = array<i64: 128, 128>}, {pipeline_mode = #tpu.pipeline_mode<synchronous>, transform_indices = @transform_6, window_bounds = array<i64: 1, 128>}, {transform_indices = @transform_7, window_bounds = array<i64: 8, 128>}]} {
    %c0 = arith.constant 0 : index
    %c0_0 = arith.constant 0 : index
    %0 = vector.load %arg1[%c0, %c0_0] : memref<8x128xf32, #tpu.memory_space<vmem>>, vector<8x128xf32>
    %c0_1 = arith.constant 0 : index
    %c0_2 = arith.constant 0 : index
    %1 = vector.load %arg2[%c0_1, %c0_2] : memref<128x256xf32, #tpu.memory_space<vmem>>, vector<128x256xf32>
    %cst = arith.constant dense<0.000000e+00> : vector<8x256xf32>
    %2 = tpu.matmul %0, %1, %cst {dimension_numbers = #tpu.dot_dimension_numbers<[1], [0], [0], [1], [0, 0, 1, 1], [], []>} : vector<8x128xf32>, vector<128x256xf32>, vector<8x256xf32> -> vector<8x256xf32>
    %c0_3 = arith.constant 0 : index
    %c0_4 = arith.constant 0 : index
    %3 = vector.load %arg3[%c0_3, %c0_4] : memref<1x256xf32, #tpu.memory_space<vmem>>, vector<1x256xf32>
    %4 = vector.broadcast %3 : vector<1x256xf32> to vector<8x256xf32>
    %5 = arith.addf %2, %4 : vector<8x256xf32>
    %cst_5 = arith.constant 0.000000e+00 : f32
    %6 = vector.broadcast %cst_5 : f32 to vector<8x256xf32>
    %7 = arith.maximumf %5, %6 : vector<8x256xf32>
    %c0_6 = arith.constant 0 : index
    %c0_7 = arith.constant 0 : index
    %8 = vector.load %arg4[%c0_6, %c0_7] : memref<256x128xf32, #tpu.memory_space<vmem>>, vector<256x128xf32>
    %cst_8 = arith.constant dense<0.000000e+00> : vector<8x128xf32>
    %9 = tpu.matmul %7, %8, %cst_8 {dimension_numbers = #tpu.dot_dimension_numbers<[1], [0], [0], [1], [0, 0, 1, 1], [], []>} : vector<8x256xf32>, vector<256x128xf32>, vector<8x128xf32> -> vector<8x128xf32>
    %c0_9 = arith.constant 0 : index
    %c0_10 = arith.constant 0 : index
    %10 = vector.load %arg5[%c0_9, %c0_10] : memref<1x128xf32, #tpu.memory_space<vmem>>, vector<1x128xf32>
    %11 = vector.broadcast %10 : vector<1x128xf32> to vector<8x128xf32>
    %12 = arith.addf %9, %11 : vector<8x128xf32>
    %cst_11 = arith.constant 0.000000e+00 : f32
    %13 = vector.broadcast %cst_11 : f32 to vector<8x128xf32>
    %14 = arith.maximumf %12, %13 : vector<8x128xf32>
    %c0_12 = arith.constant 0 : index
    %c0_13 = arith.constant 0 : index
    %15 = vector.load %arg6[%c0_12, %c0_13] : memref<128x128xf32, #tpu.memory_space<vmem>>, vector<128x128xf32>
    %cst_14 = arith.constant dense<0.000000e+00> : vector<8x128xf32>
    %16 = tpu.matmul %14, %15, %cst_14 {dimension_numbers = #tpu.dot_dimension_numbers<[1], [0], [0], [1], [0, 0, 1, 1], [], []>} : vector<8x128xf32>, vector<128x128xf32>, vector<8x128xf32> -> vector<8x128xf32>
    %c0_15 = arith.constant 0 : index
    %c0_16 = arith.constant 0 : index
    %17 = vector.load %arg7[%c0_15, %c0_16] : memref<1x128xf32, #tpu.memory_space<vmem>>, vector<1x128xf32>
    %18 = vector.broadcast %17 : vector<1x128xf32> to vector<8x128xf32>
    %19 = arith.addf %16, %18 : vector<8x128xf32>
    %c0_17 = arith.constant 0 : index
    %c0_18 = arith.constant 0 : index
    %20 = vector.load %arg8[%c0_17, %c0_18] : memref<8x128xf32, #tpu.memory_space<vmem>>, vector<8x128xf32>
    tpu.vector_store %arg8[%c0_17, %c0_18], %19 {strides = array<i32>} : memref<8x128xf32, #tpu.memory_space<vmem>>, vector<8x128xf32>,
    return
  }
  func.func @transform_0(%arg0: i32) -> (i32, i32) {
    %c0_i32 = arith.constant 0 : i32
    %c0_i32_0 = arith.constant 0 : i32
    return %arg0, %c0_i32 : i32, i32
  }
  func.func @transform_1(%arg0: i32) -> (i32, i32) {
    %c0_i32 = arith.constant 0 : i32
    %c0_i32_0 = arith.constant 0 : i32
    %c0_i32_1 = arith.constant 0 : i32
    return %c0_i32, %c0_i32_0 : i32, i32
  }
  func.func @transform_2(%arg0: i32) -> (i32, i32) {
    %c0_i32 = arith.constant 0 : i32
    %c0_i32_0 = arith.constant 0 : i32
    %c0_i32_1 = arith.constant 0 : i32
    return %c0_i32, %c0_i32_0 : i32, i32
  }
  func.func @transform_3(%arg0: i32) -> (i32, i32) {
    %c0_i32 = arith.constant 0 : i32
    %c0_i32_0 = arith.constant 0 : i32
    %c0_i32_1 = arith.constant 0 : i32
    return %c0_i32, %c0_i32_0 : i32, i32
  }
  func.func @transform_4(%arg0: i32) -> (i32, i32) {
    %c0_i32 = arith.constant 0 : i32
    %c0_i32_0 = arith.constant 0 : i32
    %c0_i32_1 = arith.constant 0 : i32
    return %c0_i32, %c0_i32_0 : i32, i32
  }
  func.func @transform_5(%arg0: i32) -> (i32, i32) {
    %c0_i32 = arith.constant 0 : i32
    %c0_i32_0 = arith.constant 0 : i32
    %c0_i32_1 = arith.constant 0 : i32
    return %c0_i32, %c0_i32_0 : i32, i32
  }
  func.func @transform_6(%arg0: i32) -> (i32, i32) {
    %c0_i32 = arith.constant 0 : i32
    %c0_i32_0 = arith.constant 0 : i32
    %c0_i32_1 = arith.constant 0 : i32
    return %c0_i32, %c0_i32_0 : i32, i32
  }
  func.func @transform_7(%arg0: i32) -> (i32, i32) {
    %c0_i32 = arith.constant 0 : i32
    %c0_i32_0 = arith.constant 0 : i32
    return %arg0, %c0_i32 : i32, i32
  }
}

</mosaic_0001>

<llo_original>
// kernel: _forward_impl.1
$region0: #{_forward_impl.1}
  #allocation0 [shape = 'u32[]', space=smem, size = 0x4, offset = 0x4, fixed_abs, tag = 'smem constant byte address 0x4 - core index']
  #allocation1 [shape = 'u32[144,128]{1,0:T(1,128)}', space=vmem, size = 0x12000, scoped, tag = 'internal scratch']
  %s0 = inlined_call_operand.vmem [shape: f32[8,128], index: 0, kind: input, shape index: {}]
  %s1 = inlined_call_operand.hbm [shape: f32[128,256], index: 1, kind: input, shape index: {}]
  %s2 = inlined_call_operand.vmem [shape: f32[1,256], index: 2, kind: input, shape index: {}]
  %s3 = inlined_call_operand.hbm [shape: f32[256,128], index: 3, kind: input, shape index: {}]
  %s4 = inlined_call_operand.vmem [shape: f32[1,128], index: 4, kind: input, shape index: {}]
  %s5 = inlined_call_operand.hbm [shape: f32[128,128], index: 5, kind: input, shape index: {}]
  %s6 = inlined_call_operand.vmem [shape: f32[1,128], index: 6, kind: input, shape index: {}]
  %s7 = inlined_call_operand.vmem [shape: f32[8,128], index: 7, kind: output, shape index: {}]
  %s8 = sld [smem:[#allocation0]]
  $region50: #{_forward_impl.1} parent=0
    _
  %s10 = ssub.s32 1, %s8
  %s11 = scalar_select 0, %s10, %s8
  $region1: #{_forward_impl.1} parent=0
    #allocation2 [shape = 'u8[131072]{0}', space=vmem, size = 0x20000, scoped, tag = 'input window, operand 1, single buffered']
    #allocation3 [shape = 's32[1]{0}', space=sflag, size = 0x4, scoped, tag = 'scoped memory for _forward_impl.1']
    #allocation4 [shape = 'u8[131072]{0}', space=vmem, size = 0x20000, scoped, tag = 'input window, operand 3, single buffered']
    #allocation5 [shape = 's32[1]{0}', space=sflag, size = 0x4, scoped, tag = 'scoped memory for _forward_impl.1']
    #allocation6 [shape = 'u8[65536]{0}', space=vmem, size = 0x10000, scoped, tag = 'input window, operand 5, single buffered']
    %12 = vsyncpa [#allocation3], 0
    %13 = vsyncpa [#allocation5], 0
    // Predicated region
    $region2: #{_forward_impl.1} parent=1 // pred_check
      _
    $region3: #{_forward_impl.1} parent=1 // pred_check_branch
      %15 = sbr.rel (0) target = $region5
    $region4: #{_forward_impl.1} parent=1 // pred_region
      _
    $region5: #{_forward_impl.1} parent=1 // pred_fallthru
      _
    // Predicated region
    $region6: #{_forward_impl.1} parent=1 // pred_check
      _
    $region7: #{_forward_impl.1} parent=1 // pred_check_branch
      %17 = sbr.rel (0) target = $region9
    $region8: #{_forward_impl.1} parent=1 // pred_region
      %s19 = ssub.s32 4096, 4096
      %20 = vsyncadd [#allocation3], %s19
      %s21 = sshll.u32 [#allocation2], 4
      %s22 = int_to_ptr.vmem [resolvable:$true] %s21
      %27 = dma.hbm_to_vmem [thread:$0]  %s1, 4096, %s22, [#allocation3], 256, 256, 16
    $region9: #{_forward_impl.1} parent=1 // pred_fallthru
      _
    // Predicated region
    $region10: #{_forward_impl.1} parent=1 // pred_check
      _
    $region11: #{_forward_impl.1} parent=1 // pred_check_branch
      %29 = sbr.rel (0) target = $region13
    $region12: #{_forward_impl.1} parent=1 // pred_region
      _
    $region13: #{_forward_impl.1} parent=1 // pred_fallthru
      _
    // Predicated region
    $region14: #{_forward_impl.1} parent=1 // pred_check
      _
    $region15: #{_forward_impl.1} parent=1 // pred_check_branch
      %31 = sbr.rel (0) target = $region17
    $region16: #{_forward_impl.1} parent=1 // pred_region
      %s33 = ssub.s32 4096, 4096
      %34 = vsyncadd [#allocation5], %s33
      %s35 = sshll.u32 [#allocation4], 4
      %s36 = int_to_ptr.vmem [resolvable:$true] %s35
      %41 = dma.hbm_to_vmem [thread:$0]  %s3, 4096, %s36, [#allocation5], 128, 128, 8
    $region17: #{_forward_impl.1} parent=1 // pred_fallthru
      _
    // Predicated region
    $region18: #{_forward_impl.1} parent=1 // pred_check
      _
    $region19: #{_forward_impl.1} parent=1 // pred_check_branch
      %43 = sbr.rel (0) target = $region21
    $region20: #{_forward_impl.1} parent=1 // pred_region
      _
    $region21: #{_forward_impl.1} parent=1 // pred_fallthru
      _
    // Predicated region
    $region22: #{_forward_impl.1} parent=1 // pred_check
      _
    $region23: #{_forward_impl.1} parent=1 // pred_check_branch
      %45 = sbr.rel (0) target = $region25
    $region24: #{_forward_impl.1} parent=1 // pred_region
      %s47 = ssub.s32 2048, 2048
      %48 = vsyncadd [#allocation5], %s47
      %s49 = sshll.u32 [#allocation6], 4
      %s50 = int_to_ptr.vmem [resolvable:$true] %s49
      %55 = dma.hbm_to_vmem [thread:$0]  %s5, 2048, %s50, [#allocation5], 128, 128, 8
    $region25: #{_forward_impl.1} parent=1 // pred_fallthru
      _
    // Predicated region
    $region26: #{_forward_impl.1} parent=1 // pred_check
      _
    $region27: #{_forward_impl.1} parent=1 // pred_check_branch
      %57 = sbr.rel (0) target = $region29
    $region28: #{_forward_impl.1} parent=1 // pred_region
      _
    $region29: #{_forward_impl.1} parent=1 // pred_fallthru
      _
    // Predicated region
    $region30: #{_forward_impl.1} parent=1 // pred_check
      _
    $region31: #{_forward_impl.1} parent=1 // pred_check_branch
      %59 = sbr.rel (0) target = $region33
    $region32: #{_forward_impl.1} parent=1 // pred_region
      %60 = dma.done [#allocation3], 4096
    $region33: #{_forward_impl.1} parent=1 // pred_fallthru
      _
    // Predicated region
    $region34: #{_forward_impl.1} parent=1 // pred_check
      _
    $region35: #{_forward_impl.1} parent=1 // pred_check_branch
      %62 = sbr.rel (0) target = $region37
    $region36: #{_forward_impl.1} parent=1 // pred_region
      %63 = dma.done [#allocation5], 4096
    $region37: #{_forward_impl.1} parent=1 // pred_fallthru
      _
    // Predicated region
    $region38: #{_forward_impl.1} parent=1 // pred_check
      _
    $region39: #{_forward_impl.1} parent=1 // pred_check_branch
      %65 = sbr.rel (0) target = $region41
    $region40: #{_forward_impl.1} parent=1 // pred_region
      %66 = dma.done [#allocation5], 2048
    $region41: #{_forward_impl.1} parent=1 // pred_fallthru
      _
    %v67 = vld [vmem:[%s0] sm:$0xff]
    %v68 = vld [vmem:[#allocation2] sm:$0xff]
    %v69 = vld [vmem:[#allocation2 + $0x8] sm:$0xff]
    %v70 = vld [vmem:[#allocation2 + $0x10] sm:$0xff]
    %v71 = vld [vmem:[#allocation2 + $0x18] sm:$0xff]
    %v72 = vld [vmem:[#allocation2 + $0x20] sm:$0xff]
    %v73 = vld [vmem:[#allocation2 + $0x28] sm:$0xff]
    %v74 = vld [vmem:[#allocation2 + $0x30] sm:$0xff]
    %v75 = vld [vmem:[#allocation2 + $0x38] sm:$0xff]
    %v76 = vld [vmem:[#allocation2 + $0x40] sm:$0xff]
    %v77 = vld [vmem:[#allocation2 + $0x48] sm:$0xff]
    %v78 = vld [vmem:[#allocation2 + $0x50] sm:$0xff]
    %v79 = vld [vmem:[#allocation2 + $0x58] sm:$0xff]
    %v80 = vld [vmem:[#allocation2 + $0x60] sm:$0xff]
    %v81 = vld [vmem:[#allocation2 + $0x68] sm:$0xff]
    %v82 = vld [vmem:[#allocation2 + $0x70] sm:$0xff]
    %v83 = vld [vmem:[#allocation2 + $0x78] sm:$0xff]
    %v84 = vld [vmem:[#allocation2 + $0x80] sm:$0xff]
    %v85 = vld [vmem:[#allocation2 + $0x88] sm:$0xff]
    %v86 = vld [vmem:[#allocation2 + $0x90] sm:$0xff]
    %v87 = vld [vmem:[#allocation2 + $0x98] sm:$0xff]
    %v88 = vld [vmem:[#allocation2 + $0xa0] sm:$0xff]
    %v89 = vld [vmem:[#allocation2 + $0xa8] sm:$0xff]
    %v90 = vld [vmem:[#allocation2 + $0xb0] sm:$0xff]
    %v91 = vld [vmem:[#allocation2 + $0xb8] sm:$0xff]
    %v92 = vld [vmem:[#allocation2 + $0xc0] sm:$0xff]
    %v93 = vld [vmem:[#allocation2 + $0xc8] sm:$0xff]
    %v94 = vld [vmem:[#allocation2 + $0xd0] sm:$0xff]
    %v95 = vld [vmem:[#allocation2 + $0xd8] sm:$0xff]
    %v96 = vld [vmem:[#allocation2 + $0xe0] sm:$0xff]
    %v97 = vld [vmem:[#allocation2 + $0xe8] sm:$0xff]
    %v98 = vld [vmem:[#allocation2 + $0xf0] sm:$0xff]
    %v99 = vld [vmem:[#allocation2 + $0xf8] sm:$0xff]
    %v100 = vld [vmem:[%s2] sm:$0x3]
    %v102 = vlaneseq
    %v103 = vshrl.u32 %v102, 7
    %v104 = vsub.s32 0, %v103
    %v105 = vrot.slane %v100, %v104
    %v106 = vlaneseq
    %v107 = vshrl.u32 %v106, 7
    %v108 = vsub.s32 1, %v107
    %v109 = vrot.slane %v100, %v108
    %112 = vmatprep.subr.mxu0 %v69
    %113 = vmatpush1.msra.mxu0 %v68
    %114 = vmatprep.subr.mxu0 %v71
    %115 = vmatpush1.msra.mxu0 %v70
    %116 = vmatprep.subr.mxu0 %v73
    %117 = vmatpush1.msra.mxu0 %v72
    %118 = vmatprep.subr.mxu0 %v75
    %119 = vmatpush1.msra.mxu0 %v74
    %120 = vmatprep.subr.mxu0 %v77
    %121 = vmatpush1.msra.mxu0 %v76
    %122 = vmatprep.subr.mxu0 %v79
    %123 = vmatpush1.msra.mxu0 %v78
    %124 = vmatprep.subr.mxu0 %v81
    %125 = vmatpush1.msra.mxu0 %v80
    %126 = vmatprep.subr.mxu0 %v83
    %127 = vmatpush1.msra.mxu0 %v82
    %128 = vmatprep.subr.mxu0 %v85
    %129 = vmatpush1.msra.mxu0 %v84
    %130 = vmatprep.subr.mxu0 %v87
    %131 = vmatpush1.msra.mxu0 %v86
    %132 = vmatprep.subr.mxu0 %v89
    %133 = vmatpush1.msra.mxu0 %v88
    %134 = vmatprep.subr.mxu0 %v91
    %135 = vmatpush1.msra.mxu0 %v90
    %136 = vmatprep.subr.mxu0 %v93
    %137 = vmatpush1.msra.mxu0 %v92
    %138 = vmatprep.subr.mxu0 %v95
    %139 = vmatpush1.msra.mxu0 %v94
    %140 = vmatprep.subr.mxu0 %v97
    %141 = vmatpush1.msra.mxu0 %v96
    %142 = vmatprep.subr.mxu0 %v99
    %143 = vmatpush1.msra.mxu0 %v98
    %144 = vmatprep.subr.mxu0 0.0
    %145 = vmatpush1.msra.mxu0 0.0
    %146 = vmatprep.subr.mxu0 0.0
    %147 = vmatpush1.msra.mxu0 0.0
    %148 = vmatprep.subr.mxu0 0.0
    %149 = vmatpush1.msra.mxu0 0.0
    %150 = vmatprep.subr.mxu0 0.0
    %151 = vmatpush1.msra.mxu0 0.0
    %152 = vmatprep.subr.mxu0 0.0
    %153 = vmatpush1.msra.mxu0 0.0
    %154 = vmatprep.subr.mxu0 0.0
    %155 = vmatpush1.msra.mxu0 0.0
    %156 = vmatprep.subr.mxu0 0.0
    %157 = vmatpush1.msra.mxu0 0.0
    %158 = vmatprep.subr.mxu0 0.0
    %159 = vmatpush1.msra.mxu0 0.0
    %160 = vmatprep.subr.mxu0 0.0
    %161 = vmatpush1.msra.mxu0 0.0
    %162 = vmatprep.subr.mxu0 0.0
    %163 = vmatpush1.msra.mxu0 0.0
    %164 = vmatprep.subr.mxu0 0.0
    %165 = vmatpush1.msra.mxu0 0.0
    %166 = vmatprep.subr.mxu0 0.0
    %167 = vmatpush1.msra.mxu0 0.0
    %168 = vmatprep.subr.mxu0 0.0
    %169 = vmatpush1.msra.mxu0 0.0
    %170 = vmatprep.subr.mxu0 0.0
    %171 = vmatpush1.msra.mxu0 0.0
    %172 = vmatprep.subr.mxu0 0.0
    %173 = vmatpush1.msra.mxu0 0.0
    %174 = vmatprep.subr.mxu0 0.0
    %175 = vmatpush1.msra.mxu0 0.0
    %176 = vmatprep.mubr.f32.mxu0 0.0
    %177 = vmatmul.mubr.f32.gmra.mrb[0].mxu0 %v67
    %v178 = vpop.f32.mrb[0].mxu0
    %v179 = vadd.f32 %v105, %v178
    %v180 = vpop.f32.mrb[0].mxu0
    %v181 = vadd.f32 %v109, %v180
    %182 = vdwg.mxu0
    %v183 = vmax.f32 %v179, 0.0
    %v184 = vmax.f32 %v181, 0.0
    %v185 = vld [vmem:[#allocation4] sm:$0xff]
    %v186 = vld [vmem:[#allocation4 + $0x8] sm:$0xff]
    %v187 = vld [vmem:[#allocation4 + $0x10] sm:$0xff]
    %v188 = vld [vmem:[#allocation4 + $0x18] sm:$0xff]
    %v189 = vld [vmem:[#allocation4 + $0x20] sm:$0xff]
    %v190 = vld [vmem:[#allocation4 + $0x28] sm:$0xff]
    %v191 = vld [vmem:[#allocation4 + $0x30] sm:$0xff]
    %v192 = vld [vmem:[#allocation4 + $0x38] sm:$0xff]
    %v193 = vld [vmem:[#allocation4 + $0x40] sm:$0xff]
    %v194 = vld [vmem:[#allocation4 + $0x48] sm:$0xff]
    %v195 = vld [vmem:[#allocation4 + $0x50] sm:$0xff]
    %v196 = vld [vmem:[#allocation4 + $0x58] sm:$0xff]
    %v197 = vld [vmem:[#allocation4 + $0x60] sm:$0xff]
    %v198 = vld [vmem:[#allocation4 + $0x68] sm:$0xff]
    %v199 = vld [vmem:[#allocation4 + $0x70] sm:$0xff]
    %v200 = vld [vmem:[#allocation4 + $0x78] sm:$0xff]
    %v201 = vld [vmem:[#allocation4 + $0x80] sm:$0xff]
    %v202 = vld [vmem:[#allocation4 + $0x88] sm:$0xff]
    %v203 = vld [vmem:[#allocation4 + $0x90] sm:$0xff]
    %v204 = vld [vmem:[#allocation4 + $0x98] sm:$0xff]
    %v205 = vld [vmem:[#allocation4 + $0xa0] sm:$0xff]
    %v206 = vld [vmem:[#allocation4 + $0xa8] sm:$0xff]
    %v207 = vld [vmem:[#allocation4 + $0xb0] sm:$0xff]
    %v208 = vld [vmem:[#allocation4 + $0xb8] sm:$0xff]
    %v209 = vld [vmem:[#allocation4 + $0xc0] sm:$0xff]
    %v210 = vld [vmem:[#allocation4 + $0xc8] sm:$0xff]
    %v211 = vld [vmem:[#allocation4 + $0xd0] sm:$0xff]
    %v212 = vld [vmem:[#allocation4 + $0xd8] sm:$0xff]
    %v213 = vld [vmem:[#allocation4 + $0xe0] sm:$0xff]
    %v214 = vld [vmem:[#allocation4 + $0xe8] sm:$0xff]
    %v215 = vld [vmem:[#allocation4 + $0xf0] sm:$0xff]
    %v216 = vld [vmem:[#allocation4 + $0xf8] sm:$0xff]
    %v217 = vld [vmem:[%s4] sm:$0x1]
    %v219 = vlaneseq
    %v220 = vshrl.u32 %v219, 7
    %v221 = vsub.s32 0, %v220
    %v222 = vrot.slane %v217, %v221
    %224 = vmatprep.subr.mxu0 0.0
    %225 = vmatpush1.msra.mxu0 %v185
    %226 = vmatprep.subr.mxu0 0.0
    %227 = vmatpush1.msra.mxu0 %v186
    %228 = vmatprep.subr.mxu0 0.0
    %229 = vmatpush1.msra.mxu0 %v187
    %230 = vmatprep.subr.mxu0 0.0
    %231 = vmatpush1.msra.mxu0 %v188
    %232 = vmatprep.subr.mxu0 0.0
    %233 = vmatpush1.msra.mxu0 %v189
    %234 = vmatprep.subr.mxu0 0.0
    %235 = vmatpush1.msra.mxu0 %v190
    %236 = vmatprep.subr.mxu0 0.0
    %237 = vmatpush1.msra.mxu0 %v191
    %238 = vmatprep.subr.mxu0 0.0
    %239 = vmatpush1.msra.mxu0 %v192
    %240 = vmatprep.subr.mxu0 0.0
    %241 = vmatpush1.msra.mxu0 %v193
    %242 = vmatprep.subr.mxu0 0.0
    %243 = vmatpush1.msra.mxu0 %v194
    %244 = vmatprep.subr.mxu0 0.0
    %245 = vmatpush1.msra.mxu0 %v195
    %246 = vmatprep.subr.mxu0 0.0
    %247 = vmatpush1.msra.mxu0 %v196
    %248 = vmatprep.subr.mxu0 0.0
    %249 = vmatpush1.msra.mxu0 %v197
    %250 = vmatprep.subr.mxu0 0.0
    %251 = vmatpush1.msra.mxu0 %v198
    %252 = vmatprep.subr.mxu0 0.0
    %253 = vmatpush1.msra.mxu0 %v199
    %254 = vmatprep.subr.mxu0 0.0
    %255 = vmatpush1.msra.mxu0 %v200
    %256 = vmatprep.subr.mxu0 0.0
    %257 = vmatpush1.msra.mxu0 %v201
    %258 = vmatprep.subr.mxu0 0.0
    %259 = vmatpush1.msra.mxu0 %v202
    %260 = vmatprep.subr.mxu0 0.0
    %261 = vmatpush1.msra.mxu0 %v203
    %262 = vmatprep.subr.mxu0 0.0
    %263 = vmatpush1.msra.mxu0 %v204
    %264 = vmatprep.subr.mxu0 0.0
    %265 = vmatpush1.msra.mxu0 %v205
    %266 = vmatprep.subr.mxu0 0.0
    %267 = vmatpush1.msra.mxu0 %v206
    %268 = vmatprep.subr.mxu0 0.0
    %269 = vmatpush1.msra.mxu0 %v207
    %270 = vmatprep.subr.mxu0 0.0
    %271 = vmatpush1.msra.mxu0 %v208
    %272 = vmatprep.subr.mxu0 0.0
    %273 = vmatpush1.msra.mxu0 %v209
    %274 = vmatprep.subr.mxu0 0.0
    %275 = vmatpush1.msra.mxu0 %v210
    %276 = vmatprep.subr.mxu0 0.0
    %277 = vmatpush1.msra.mxu0 %v211
    %278 = vmatprep.subr.mxu0 0.0
    %279 = vmatpush1.msra.mxu0 %v212
    %280 = vmatprep.subr.mxu0 0.0
    %281 = vmatpush1.msra.mxu0 %v213
    %282 = vmatprep.subr.mxu0 0.0
    %283 = vmatpush1.msra.mxu0 %v214
    %284 = vmatprep.subr.mxu0 0.0
    %285 = vmatpush1.msra.mxu0 %v215
    %286 = vmatprep.subr.mxu0 0.0
    %287 = vmatpush1.msra.mxu0 %v216
    %288 = vmatprep.mubr.f32.mxu0 %v184
    %289 = vmatmul.mubr.f32.gmra.mrb[0].mxu0 %v183
    %v290 = vpop.f32.mrb[0].mxu0
    %v291 = vadd.f32 %v222, %v290
    %v292 = vpop.f32.mrb[0].mxu0
    %293 = vdwg.mxu0
    %v294 = vmax.f32 %v291, 0.0
    %v295 = vld [vmem:[#allocation6] sm:$0xff]
    %v296 = vld [vmem:[#allocation6 + $0x8] sm:$0xff]
    %v297 = vld [vmem:[#allocation6 + $0x10] sm:$0xff]
    %v298 = vld [vmem:[#allocation6 + $0x18] sm:$0xff]
    %v299 = vld [vmem:[#allocation6 + $0x20] sm:$0xff]
    %v300 = vld [vmem:[#allocation6 + $0x28] sm:$0xff]
    %v301 = vld [vmem:[#allocation6 + $0x30] sm:$0xff]
    %v302 = vld [vmem:[#allocation6 + $0x38] sm:$0xff]
    %v303 = vld [vmem:[#allocation6 + $0x40] sm:$0xff]
    %v304 = vld [vmem:[#allocation6 + $0x48] sm:$0xff]
    %v305 = vld [vmem:[#allocation6 + $0x50] sm:$0xff]
    %v306 = vld [vmem:[#allocation6 + $0x58] sm:$0xff]
    %v307 = vld [vmem:[#allocation6 + $0x60] sm:$0xff]
    %v308 = vld [vmem:[#allocation6 + $0x68] sm:$0xff]
    %v309 = vld [vmem:[#allocation6 + $0x70] sm:$0xff]
    %v310 = vld [vmem:[#allocation6 + $0x78] sm:$0xff]
    %v311 = vld [vmem:[%s6] sm:$0x1]
    %v313 = vlaneseq
    %v314 = vshrl.u32 %v313, 7
    %v315 = vsub.s32 0, %v314
    %v316 = vrot.slane %v311, %v315
    %318 = vmatprep.subr.mxu0 0.0
    %319 = vmatpush1.msra.mxu0 %v295
    %320 = vmatprep.subr.mxu0 0.0
    %321 = vmatpush1.msra.mxu0 %v296
    %322 = vmatprep.subr.mxu0 0.0
    %323 = vmatpush1.msra.mxu0 %v297
    %324 = vmatprep.subr.mxu0 0.0
    %325 = vmatpush1.msra.mxu0 %v298
    %326 = vmatprep.subr.mxu0 0.0
    %327 = vmatpush1.msra.mxu0 %v299
    %328 = vmatprep.subr.mxu0 0.0
    %329 = vmatpush1.msra.mxu0 %v300
    %330 = vmatprep.subr.mxu0 0.0
    %331 = vmatpush1.msra.mxu0 %v301
    %332 = vmatprep.subr.mxu0 0.0
    %333 = vmatpush1.msra.mxu0 %v302
    %334 = vmatprep.subr.mxu0 0.0
    %335 = vmatpush1.msra.mxu0 %v303
    %336 = vmatprep.subr.mxu0 0.0
    %337 = vmatpush1.msra.mxu0 %v304
    %338 = vmatprep.subr.mxu0 0.0
    %339 = vmatpush1.msra.mxu0 %v305
    %340 = vmatprep.subr.mxu0 0.0
    %341 = vmatpush1.msra.mxu0 %v306
    %342 = vmatprep.subr.mxu0 0.0
    %343 = vmatpush1.msra.mxu0 %v307
    %344 = vmatprep.subr.mxu0 0.0
    %345 = vmatpush1.msra.mxu0 %v308
    %346 = vmatprep.subr.mxu0 0.0
    %347 = vmatpush1.msra.mxu0 %v309
    %348 = vmatprep.subr.mxu0 0.0
    %349 = vmatpush1.msra.mxu0 %v310
    %350 = vmatprep.subr.mxu0 0.0
    %351 = vmatpush1.msra.mxu0 0.0
    %352 = vmatprep.subr.mxu0 0.0
    %353 = vmatpush1.msra.mxu0 0.0
    %354 = vmatprep.subr.mxu0 0.0
    %355 = vmatpush1.msra.mxu0 0.0
    %356 = vmatprep.subr.mxu0 0.0
    %357 = vmatpush1.msra.mxu0 0.0
    %358 = vmatprep.subr.mxu0 0.0
    %359 = vmatpush1.msra.mxu0 0.0
    %360 = vmatprep.subr.mxu0 0.0
    %361 = vmatpush1.msra.mxu0 0.0
    %362 = vmatprep.subr.mxu0 0.0
    %363 = vmatpush1.msra.mxu0 0.0
    %364 = vmatprep.subr.mxu0 0.0
    %365 = vmatpush1.msra.mxu0 0.0
    %366 = vmatprep.subr.mxu0 0.0
    %367 = vmatpush1.msra.mxu0 0.0
    %368 = vmatprep.subr.mxu0 0.0
    %369 = vmatpush1.msra.mxu0 0.0
    %370 = vmatprep.subr.mxu0 0.0
    %371 = vmatpush1.msra.mxu0 0.0
    %372 = vmatprep.subr.mxu0 0.0
    %373 = vmatpush1.msra.mxu0 0.0
    %374 = vmatprep.subr.mxu0 0.0
    %375 = vmatpush1.msra.mxu0 0.0
    %376 = vmatprep.subr.mxu0 0.0
    %377 = vmatpush1.msra.mxu0 0.0
    %378 = vmatprep.subr.mxu0 0.0
    %379 = vmatpush1.msra.mxu0 0.0
    %380 = vmatprep.subr.mxu0 0.0
    %381 = vmatpush1.msra.mxu0 0.0
    %382 = vmatprep.mubr.f32.mxu0 0.0
    %383 = vmatmul.mubr.f32.gmra.mrb[0].mxu0 %v294
    %v384 = vpop.f32.mrb[0].mxu0
    %v385 = vadd.f32 %v316, %v384
    %v386 = vpop.f32.mrb[0].mxu0
    %387 = vdwg.mxu0
    %388 = vst [vmem:[%s7] sm:$0xff] %v385
    // Predicated region
    $region42: #{_forward_impl.1} parent=1 // pred_check
      _
    $region43: #{_forward_impl.1} parent=1 // pred_check_branch
      %390 = sbr.rel (0) target = $region45
    $region44: #{_forward_impl.1} parent=1 // pred_region
      _
    $region45: #{_forward_impl.1} parent=1 // pred_fallthru
      _
    // Predicated region
    $region46: #{_forward_impl.1} parent=1 // pred_check
      _
    $region47: #{_forward_impl.1} parent=1 // pred_check_branch
      %392 = sbr.rel (0) target = $region49
    $region48: #{_forward_impl.1} parent=1 // pred_region
      _
    $region49: #{_forward_impl.1} parent=1 // pred_fallthru
      _
    %393 = vsyncpa [#allocation3], 1
    %394 = vsyncpa [#allocation5], 1

</llo_original>
